<compile_context>
chip_gen: v7x
topology: tpu7x:2x2x1
jax: 0.10.0
libtpu: 0.0.40
codegen_flags: <defaults>
</compile_context>

<pallas_src>
import functools
import math

import jax
import jax.numpy as jnp
from jax.experimental import pallas as pl
from jax.experimental.pallas import tpu as pltpu


def _pos_embed_kernel(fp_ref, out_ref, *, H: int, W: int):
    """Build one (th, W, dim) tile of the positional embedding in VMEM.

    fp_ref  : (2, 2F) f32   row 0 = [inv_freq | inv_freq], row 1 = [0 | pi/2]
    out_ref : (th, W, dim)  output tile (rows j = pid*th .. pid*th+th-1)
    """
    th, tw, dim = out_ref.shape
    F2 = dim // 2                                   # 2F = dim // 2

    inv2 = fp_ref[0:1, :]                           # (1, 2F)
    phase = fp_ref[1:2, :]                          # (1, 2F)

    # ---- W-axis slab -> channels [0 : 2F)   (depends on column index i) ----
    i = jax.lax.broadcasted_iota(jnp.int32, (tw, F2), 0).astype(jnp.float32)
    emb_w = jnp.sin(i * (32.0 / W) * inv2 + phase)          # (tw, 2F) f32
    emb_w = emb_w.astype(out_ref.dtype)

    # ---- H-axis slab -> channels [2F : dim) (depends on row index j) -------
    j = (jax.lax.broadcasted_iota(jnp.int32, (th, F2), 0)
         + pl.program_id(0) * th).astype(jnp.float32)
    emb_h = jnp.sin(j * (32.0 / H) * inv2 + phase)          # (th, 2F) f32
    emb_h = emb_h.astype(out_ref.dtype)

    # Two direct slice stores; each broadcasts its small slab into the tile.
    out_ref[:, :, 0:F2] = jnp.broadcast_to(emb_w[None, :, :], (th, tw, F2))
    out_ref[:, :, F2:dim] = jnp.broadcast_to(emb_h[:, None, :], (th, tw, F2))


def position_embedder_forward(H: int, W: int, dim: int, *,
                              out_dtype=jnp.float32,
                              max_tile_bytes: int = 4 << 20):
    """Reproduces PositionEmbedder(dim).forward(H, W, device) -> (1, H*W, dim).

    out_dtype may be set to jnp.bfloat16 if the consumer adds the embedding in
    bf16 (halves HBM writeback bytes on a write-bound kernel).
    """
    assert dim % 4 == 0, "dim must be divisible by 4"
    F_ = dim // 4
    F2 = dim // 2

    # Deterministic "buffer", exactly as in __init__:
    # inv_freq = 1 / 10000 ** (arange(0, dim//2, 2) / (dim//2))
    inv_freq = 1.0 / (10000.0 ** (
        jnp.arange(0, dim // 2, 2, dtype=jnp.float32) / (dim // 2)))
    inv2 = jnp.concatenate([inv_freq, inv_freq])                       # (2F,)
    phase = jnp.concatenate([jnp.zeros((F_,), jnp.float32),
                             jnp.full((F_,), jnp.pi / 2, jnp.float32)])
    freq_phase = jnp.stack([inv2, phase], axis=0)                      # (2, 2F)

    # Tile only along H: block = (th, W, dim).  The last two block dims equal
    # the full array dims, so the (8,128) constraint is always satisfied.
    itemsize = jnp.dtype(out_dtype).itemsize
    row_bytes = W * dim * itemsize
    th = int(max(1, min(H, max_tile_bytes // max(row_bytes, 1))))
    # Ensure >= 2 grid steps (v7x megacore + compute/writeback overlap).
    if H >= 2:
        th = min(th, -(-H // 2))
    grid = (pl.cdiv(H, th),)

    # Raise the scoped-VMEM limit only if a single (ragged) row forced an
    # oversized block (double-buffered output must fit).
    tile_bytes = th * W * dim * itemsize
    vmem_limit = None
    if 2 * tile_bytes > (12 << 20):
        vmem_limit = int(2 * tile_bytes + (4 << 20))

    out3d = pl.pallas_call(
        functools.partial(_pos_embed_kernel, H=H, W=W),
        out_shape=jax.ShapeDtypeStruct((H, W, dim), out_dtype),
        grid_spec=pl.GridSpec(
            grid=grid,
            in_specs=[pl.BlockSpec((2, F2), lambda i: (0, 0))],
            out_specs=pl.BlockSpec((th, W, dim), lambda i: (i, 0, 0)),
        ),
        compiler_params=pltpu.CompilerParams(
            dimension_semantics=("parallel",),
            vmem_limit_bytes=vmem_limit),
    )(freq_phase)

    # (H, W, dim) is contiguous exactly in (j*W + i, dim) order -> free reshape.
    return out3d.reshape(1, H * W, dim)


def _reference_forward(H: int, W: int, dim: int):
    """Pure-JAX reference mirroring the PyTorch code line-by-line."""
    inv_freq = 1.0 / (10000.0 ** (
        jnp.arange(0, dim // 2, 2, dtype=jnp.float32) / (dim // 2)))
    range_h = jnp.arange(H, dtype=jnp.float32) * 32.0 / H
    range_w = jnp.arange(W, dtype=jnp.float32) * 32.0 / W
    gh, gw = jnp.meshgrid(range_w, range_h, indexing='ij')   # (W, H)
    gh = gh.T.reshape(-1)
    gw = gw.T.reshape(-1)

    def sincos(g):
        out = jnp.einsum('i,j->ij', g, inv_freq)
        return jnp.concatenate([jnp.sin(out), jnp.cos(out)], axis=-1)

    return jnp.concatenate([sincos(gh), sincos(gw)], axis=-1)[None]


if __name__ == "__main__":
    # forward() takes no tensor input, only (H, W); key for interface parity.
    _ = jax.random.PRNGKey(0)

    # Primary check: H=W=8, dim=32 (grid of 2 H-steps, non-lane-aligned 2F=16).
    H, W, dim = 8, 8, 32
    out = jax.block_until_ready(position_embedder_forward(H, W, dim))
    ref = _reference_forward(H, W, dim)
    assert out.shape == (1, H * W, dim), out.shape
    # Folded scale + sin(x+pi/2) phase trick deviate from the torch op order at
    # the ~1-ulp level; tolerance accounts for that.
    assert jnp.allclose(out, ref, atol=2e-5, rtol=2e-5), \
        float(jnp.max(jnp.abs(out - ref)))

    # Secondary check: ragged H (th=5 over H=12 -> grid=(3,), last block partial).
    H2, W2, dim2 = 12, 8, 64
    out2 = jax.block_until_ready(
        position_embedder_forward(H2, W2, dim2,
                                  max_tile_bytes=5 * W2 * dim2 * 4))
    ref2 = _reference_forward(H2, W2, dim2)
    assert out2.shape == (1, H2 * W2, dim2), out2.shape
    assert jnp.allclose(out2, ref2, atol=2e-5, rtol=2e-5), \
        float(jnp.max(jnp.abs(out2 - ref2)))

    print("KERNEL_OK")
</pallas_src>

<mosaic_0001>
module attributes {stable_mosaic.version = 11 : i64} {
  func.func @_pos_embed_kernel(%arg0: i32, %arg1: memref<2x16xf32, #tpu.memory_space<vmem>>, %arg2: memref<4x8x32xf32, #tpu.memory_space<vmem>>) attributes {dimension_semantics = [#tpu.dimension_semantics<parallel>], iteration_bounds = array<i64: 2>, scalar_prefetch = 0 : i64, scratch_operands = 0 : i64, tpu.core_type = #tpu.core_type<tc>, window_params = [{pipeline_mode = #tpu.pipeline_mode<synchronous>, transform_indices = @transform_0, window_bounds = array<i64: 2, 16>}, {transform_indices = @transform_1, window_bounds = array<i64: 4, 8, 32>}]} {
    %c0 = arith.constant 0 : index
    %c0_0 = arith.constant 0 : index
    %0 = vector.load %arg1[%c0, %c0_0] : memref<2x16xf32, #tpu.memory_space<vmem>>, vector<1x16xf32>
    %c1 = arith.constant 1 : index
    %c0_1 = arith.constant 0 : index
    %1 = vector.load %arg1[%c1, %c0_1] : memref<2x16xf32, #tpu.memory_space<vmem>>, vector<1x16xf32>
    %2 = tpu.iota {dimensions = array<i32: 0>} : vector<8x16xi32>
    %3 = arith.sitofp %2 : vector<8x16xi32> to vector<8x16xf32>
    %cst = arith.constant 4.000000e+00 : f32
    %4 = vector.broadcast %cst : f32 to vector<8x16xf32>
    %5 = arith.mulf %3, %4 : vector<8x16xf32>
    %6 = vector.broadcast %0 : vector<1x16xf32> to vector<8x16xf32>
    %7 = arith.mulf %5, %6 : vector<8x16xf32>
    %8 = vector.broadcast %1 : vector<1x16xf32> to vector<8x16xf32>
    %9 = arith.addf %7, %8 : vector<8x16xf32>
    %10 = math.sin %9 : vector<8x16xf32>
    %11 = tpu.iota {dimensions = array<i32: 0>} : vector<4x16xi32>
    %c4_i32 = arith.constant 4 : i32
    %12 = arith.muli %arg0, %c4_i32 : i32
    %13 = vector.broadcast %12 : i32 to vector<4x16xi32>
    %14 = arith.addi %11, %13 : vector<4x16xi32>
    %15 = arith.sitofp %14 : vector<4x16xi32> to vector<4x16xf32>
    %cst_2 = arith.constant 4.000000e+00 : f32
    %16 = vector.broadcast %cst_2 : f32 to vector<4x16xf32>
    %17 = arith.mulf %15, %16 : vector<4x16xf32>
    %18 = vector.broadcast %0 : vector<1x16xf32> to vector<4x16xf32>
    %19 = arith.mulf %17, %18 : vector<4x16xf32>
    %20 = vector.broadcast %1 : vector<1x16xf32> to vector<4x16xf32>
    %21 = arith.addf %19, %20 : vector<4x16xf32>
    %22 = math.sin %21 : vector<4x16xf32>
    %23 = vector.shape_cast %10 : vector<8x16xf32> to vector<1x8x16xf32>
    %24 = vector.shape_cast %23 : vector<1x8x16xf32> to vector<1x8x16xf32>
    %25 = vector.broadcast %24 : vector<1x8x16xf32> to vector<4x8x16xf32>
    %c0_3 = arith.constant 0 : index
    %c0_4 = arith.constant 0 : index
    %c0_5 = arith.constant 0 : index
    %26 = vector.load %arg2[%c0_3, %c0_4, %c0_5] : memref<4x8x32xf32, #tpu.memory_space<vmem>>, vector<4x8x16xf32>
    tpu.vector_store %arg2[%c0_3, %c0_4, %c0_5], %25 {strides = array<i32>} : memref<4x8x32xf32, #tpu.memory_space<vmem>>, vector<4x8x16xf32>,
    %27 = vector.shape_cast %22 : vector<4x16xf32> to vector<4x1x16xf32>
    %28 = vector.shape_cast %27 : vector<4x1x16xf32> to vector<4x1x16xf32>
    %29 = vector.broadcast %28 : vector<4x1x16xf32> to vector<4x8x16xf32>
    %c0_6 = arith.constant 0 : index
    %c0_7 = arith.constant 0 : index
    %c16 = arith.constant 16 : index
    %30 = vector.load %arg2[%c0_6, %c0_7, %c16] : memref<4x8x32xf32, #tpu.memory_space<vmem>>, vector<4x8x16xf32>
    tpu.vector_store %arg2[%c0_6, %c0_7, %c16], %29 {strides = array<i32>} : memref<4x8x32xf32, #tpu.memory_space<vmem>>, vector<4x8x16xf32>,
    return
  }
  func.func @transform_0(%arg0: i32) -> (i32, i32) {
    %c0_i32 = arith.constant 0 : i32
    %c0_i32_0 = arith.constant 0 : i32
    %c0_i32_1 = arith.constant 0 : i32
    return %c0_i32, %c0_i32_0 : i32, i32
  }
  func.func @transform_1(%arg0: i32) -> (i32, i32, i32) {
    %c0_i32 = arith.constant 0 : i32
    %c0_i32_0 = arith.constant 0 : i32
    %c0_i32_1 = arith.constant 0 : i32
    return %arg0, %c0_i32, %c0_i32_0 : i32, i32, i32
  }
}

</mosaic_0001>

<llo_original>
// kernel: tpu_custom_call.1
$region0: #{tpu_custom_call.1}
  #allocation0 [shape = 'u32[]', space=smem, size = 0x4, offset = 0x4, fixed_abs, tag = 'smem constant byte address 0x4 - core index']
  #allocation1 [shape = 'u32[144,128]{1,0:T(1,128)}', space=vmem, size = 0x12000, scoped, tag = 'internal scratch']
  %s0 = inlined_call_operand.hbm [shape: f32[2,16], index: 0, kind: input, shape index: {}]
  %s1 = inlined_call_operand.hbm [shape: f32[8,8,32], index: 1, kind: output, shape index: {}]
  %s2 = sld [smem:[#allocation0]]
  $region41: #{tpu_custom_call.1} parent=0
    _
  %s4 = ssub.s32 1, %s2
  %s5 = scalar_select 0, %s4, %s2
  $region1: #{tpu_custom_call.1} parent=0
    #allocation2 [shape = 'u8[1024]{0}', space=vmem, size = 0x400, scoped, tag = 'input window, operand 0, single buffered']
    #allocation3 [shape = 's32[2]{0}', space=sflag, size = 0x8, scoped, tag = 'scoped memory for tpu_custom_call.1']
    #allocation4 [shape = 's32[2]{0}', space=sflag, size = 0x8, scoped, tag = 'scoped memory for tpu_custom_call.1']
    #allocation5 [shape = 'u8[32768]{0}', space=vmem, size = 0x8000, scoped, tag = 'output window, operand 0']
    %6 = vsyncpa [#allocation3], 0
    %7 = vsyncpa [#allocation4], 0
    %s8 = scalar_lea.sflag [#allocation4], 1
    %9 = vsyncpa %s8, 0
    loop: start=0, step=1, limit=4
    $region2: #{tpu_custom_call.1} parent=1 // loop_pre_header
      _
    $region3: #{tpu_custom_call.1} parent=1 // loop_header
      %s11 = sphi 0, %s15
      %p12 = scmp.ge.s32.totalorder %s11, 4
      %s19 = sphi 0, %s19
      %s21 = sphi 0, %s19
      %s22 = sphi 0, %s21
      %s36 = sphi 0, %s22
      %s42 = sphi 0, %s44
      %s45 = sphi 0, %s42
      %s46 = sphi 0, %s45
      %s62 = sphi 0, %s46
    $region4: #{tpu_custom_call.1} parent=1 // loop_header_branch
      %14 = sbr.rel (%p12) target = $region8
    $region5: #{tpu_custom_call.1} parent=1 // loop_body
      %s16 = ssub.s32 %s11, 1
      %s17 = ssub.s32 %s11, 2
      %s18 = sadd.s32 %s11, 1
      %s20 = sadd.s32 %s19, 1
      %p23 = scmp.eq.s32.totalorder %s11, 1
      %p24 = scmp.ne.s32.totalorder %s19, %s21
      %p25 = scmp.eq.s32.totalorder %s11, 0
      %p26 = por %p24, %p25
      %p27 = scmp.ne.s32.totalorder %s19, %s21
      %p28 = scmp.eq.s32.totalorder %s16, 1
      %p29 = por %p27, %p28
      %p30 = scmp.ne.s32.totalorder %s21, %s22
      %p31 = scmp.eq.s32.totalorder %s16, 0
      %p32 = por %p30, %p31
      %p33 = scmp.ne.s32.totalorder %s21, %s22
      %p34 = scmp.eq.s32.totalorder %s17, 1
      %p35 = por %p33, %p34
      %p37 = scmp.ne.s32.totalorder %s22, %s36
      %p38 = scmp.eq.s32.totalorder %s17, 0
      %p39 = por %p37, %p38
      %s40 = ssub.s32 %s11, %s18
      %p41 = scmp.eq.s32.totalorder %s40, 0
      %s43 = sadd.s32 %s42, 1
      %s44 = scalar_select %p41, %s42, %s43
      %p47 = pneg %p41
      %p48 = scmp.eq.s32.totalorder %s11, 1
      %p49 = por %p47, %p48
      %p50 = scmp.ne.s32.totalorder %s42, %s45
      %p51 = scmp.eq.s32.totalorder %s11, 0
      %p52 = por %p50, %p51
      %p53 = scmp.ne.s32.totalorder %s42, %s45
      %p54 = scmp.eq.s32.totalorder %s16, 1
      %p55 = por %p53, %p54
      %p56 = scmp.ne.s32.totalorder %s45, %s46
      %p57 = scmp.eq.s32.totalorder %s16, 0
      %p58 = por %p56, %p57
      %p59 = scmp.ne.s32.totalorder %s45, %s46
      %p60 = scmp.eq.s32.totalorder %s17, 1
      %p61 = por %p59, %p60
      %p63 = scmp.ne.s32.totalorder %s46, %s62
      %p64 = scmp.eq.s32.totalorder %s17, 0
      %p65 = por %p63, %p64
      %p66 = scmp.le.s32.totalorder 1, %s11
      %p67 = scmp.lt.s32.totalorder %s11, 3
      %p68 = pnand %p66, %p67
      %p69 = pneg %p68
      // Predicated region
      $region9: #{tpu_custom_call.1} parent=5 // pred_check
        _
      $region10: #{tpu_custom_call.1} parent=5 // pred_check_branch
        %71 = sbr.rel (%p68) target = $region12
      $region11: #{tpu_custom_call.1} parent=5 // pred_region
        %s72 = ssub.s32 %s11, 1
        // Predicated region
        $region13: #{tpu_custom_call.1} parent=11 // pred_check
          %p73 = pneg %p32
        $region14: #{tpu_custom_call.1} parent=11 // pred_check_branch
          %75 = sbr.rel (%p73) target = $region16
        $region15: #{tpu_custom_call.1} parent=11 // pred_region
          %s77 = ssub.s32 32, 32
          %78 = vsyncadd [#allocation3], %s77
          %s80 = sshll.u32 [#allocation2], 4
          %s81 = int_to_ptr.vmem [resolvable:$true] %s80
          %83 = dma.hbm_to_vmem [thread:$0]  %s0, 32, %s81, [#allocation3]
        $region16: #{tpu_custom_call.1} parent=11 // pred_fallthru
          _
      $region12: #{tpu_custom_call.1} parent=5 // pred_fallthru
        _
      %p84 = scmp.lt.s32.totalorder %s11, 2
      // Predicated region
      $region17: #{tpu_custom_call.1} parent=5 // pred_check
        %p85 = pneg %p84
      $region18: #{tpu_custom_call.1} parent=5 // pred_check_branch
        %87 = sbr.rel (%p85) target = $region20
      $region19: #{tpu_custom_call.1} parent=5 // pred_region
        _
      $region20: #{tpu_custom_call.1} parent=5 // pred_fallthru
        _
      %p88 = scmp.le.s32.totalorder 1, %s11
      %p89 = scmp.lt.s32.totalorder %s11, 3
      %p90 = pnand %p88, %p89
      %p91 = pneg %p90
      // Predicated region
      $region21: #{tpu_custom_call.1} parent=5 // pred_check
        _
      $region22: #{tpu_custom_call.1} parent=5 // pred_check_branch
        %93 = sbr.rel (%p90) target = $region24
      $region23: #{tpu_custom_call.1} parent=5 // pred_region
        %s94 = ssub.s32 %s11, 1
        // Predicated region
        $region25: #{tpu_custom_call.1} parent=23 // pred_check
          %p95 = pneg %p32
        $region26: #{tpu_custom_call.1} parent=23 // pred_check_branch
          %97 = sbr.rel (%p95) target = $region28
        $region27: #{tpu_custom_call.1} parent=23 // pred_region
          %98 = dma.done [#allocation3], 32
        $region28: #{tpu_custom_call.1} parent=23 // pred_fallthru
          _
        %p99 = pneg %p32
        %p100 = pneg %p29
        %p101 = pneg %p58
        %p102 = pneg %p55
        %s103 = sand.u32 %s45, 1
        %s104 = scalar_lea.sflag [#allocation4], %s103
        %s105 = sand.u32 %s45, 1
        %s106 = smul.addr %s105, 32
        %s107 = scalar_lea.vmem [#allocation5], %s106
        %s108 = smul.u32 4, %s16
        %v109 = vld [vmem:[#allocation2] sm:$0x1]
        %v110 = vld [vmem:[#allocation2 + $0x1] sm:$0x1]
        %v111 = vlaneseq
        %v112 = vshrl.u32 %v111, 7
        %v113 = vcvt.s32.f32 %v112
        %v114 = vmul.f32 %v113, 4.0
        %v115 = vlaneseq
        %v116 = vshrl.u32 %v115, 7
        %v117 = vsub.s32 0, %v116
        %v118 = vrot.slane %v109, %v117
        %v119 = vmul.f32 %v114, %v118
        %v120 = vlaneseq
        %v121 = vshrl.u32 %v120, 7
        %v122 = vsub.s32 0, %v121
        %v123 = vrot.slane %v110, %v122
        %v124 = vadd.f32 %v119, %v123
        %v125 = vand.u32 2147483647, %v124
        %vm126 = vcmp.le.f32.partialorder %v125, 0.7853982
        %vm127 = vcmp.lt.s32.totalorder %v124, 0
        %v128 = vand.u32 %v124, 2139095040
        %v129 = vshrl.u32 %v128, 23
        %v130 = vsub.s32 %v129, 127
        %v131 = vand.u32 2147483647, %v124
        %v132 = vand.u32 %v131, 8388607
        %v133 = vor.u32 %v132, 8388608
        %v134 = vsub.s32 0, %v133
        %v135 = vadd.s32 %v130, 1
        %vm136 = vcmp.gt.s32.totalorder %v135, 0
        %v137 = vsel %vm136, %v135, 0
        %v138 = vshrl.u32 %v137, 5
        %v139 = vand.u32 %v137, 31
        %v140 = vsub.s32 32, %v139
        %v141 = vshrl.u32 683565275, %v140
        %v142 = vshll.u32 683565275, %v139
        %v143 = vshrl.u32 2475754826, %v140
        %v144 = vor.u32 %v142, %v143
        %v145 = vshll.u32 2475754826, %v139
        %v146 = vshrl.u32 2131351028, %v140
        %v147 = vor.u32 %v145, %v146
        %v148 = vshll.u32 2131351028, %v139
        %v149 = vshrl.u32 2102212464, %v140
        %v150 = vor.u32 %v148, %v149
        %v151 = vshll.u32 2102212464, %v139
        %v152 = vshrl.u32 920167782, %v140
        %v153 = vor.u32 %v151, %v152
        %v154 = vshll.u32 920167782, %v139
        %v155 = vshrl.u32 1326507024, %v140
        %v156 = vor.u32 %v154, %v155
        %vm157 = vcmp.lt.s32.totalorder %v138, 1
        %vm158 = vcmp.lt.s32.totalorder %v138, 2
        %vm159 = vcmp.lt.s32.totalorder %v138, 3
        %vm160 = vcmp.lt.s32.totalorder %v138, 4
        %v161 = vsel %vm157, %v141, %v144
        %v162 = vsel %vm160, %v150, 2102212464
        %v163 = vsel %vm159, %v147, %v162
        %v164 = vsel %vm158, %v161, %v163
        %v165 = vsel %vm157, %v144, %v147
        %v166 = vsel %vm160, %v153, 920167782
        %v167 = vsel %vm159, %v150, %v166
        %v168 = vsel %vm158, %v165, %v167
        %v169 = vsel %vm157, %v147, %v150
        %v170 = vsel %vm160, %v156, 1326507024
        %v171 = vsel %vm159, %v153, %v170
        %v172 = vsel %vm158, %v169, %v171
        %v173 = vshll.u32 %v133, 8
        %v174 = vmul.u32.u64.compose %v173, %v172
        %v175 = vextract.low.u32 %v174
        %v176 = vextract.high.u32 %v174
        %v177 = vmul.u32.u64.compose %v173, %v168
        %v178 = vextract.low.u32 %v177
        %v179 = vextract.high.u32 %v177
        %v180 = vmul.u32 %v173, %v164
        %v181 = vadd.s32 %v176, %v178
        %vm182 = vc.u32 %v176, %v178
        %v183 = vadd.s32 %v179, 1
        %v184 = vsel %vm182, %v183, %v179
        %v185 = vadd.s32 %v180, %v184
        %v186 = vadd.s32 %v185, 536870912
        %v187 = vshrl.u32 %v186, 30
        %v188 = vshll.u32 %v187, 30
        %v189 = vsub.s32 %v185, %v188
        %vm190 = vcmp.lt.s32.totalorder %v189, 0
        %v191 = vsub.s32 0, %v189
        %v192 = vsel %vm190, %v191, %v189
        %v193 = vclz %v192
        %v194 = vsub.s32 %v193, 2
        %vm195 = vcmp.gt.s32.totalorder 0, %v194
        %v196 = vsel %vm195, 0, %v194
        %v197 = vsub.s32 32, %v196
        %v198 = vshll.u32 %v189, %v196
        %v199 = vshrl.u32 %v181, %v197
        %v200 = vor.u32 %v198, %v199
        %v201 = vsub.s32 4294967266, %v196
        %v202 = vadd.s32 %v201, 127
        %v203 = vshll.u32 %v202, 23
        %v204 = vor.u32 4788187, %v203
        %v205 = vand.u32 2147483647, %v204
        %v207 = vcvt.s32.f32 %v200
        %v208 = vmul.f32 %v207, %v205
        %v209 = vxor.u32 %v208, 2147483648
        %v210 = vsel %vm127, %v209, %v208
        %v211 = vsub.s32 4, %v187
        %v212 = vsel %vm127, %v211, %v187
        %v213 = vsel %vm126, %v124, %v210
        %v214 = vsel %vm126, 0, %v212
        %v215 = vcosq.f32.pop %v213
        %v216 = vsinq.f32.pop %v213
        %vm217 = vweird.f32 %v124
        %v218 = vadd.s32 %v214, 3
        %v219 = vand.u32 %v218, 3
        %vm220 = vcmp.lt.s32.totalorder %v219, 2
        %vm221 = vcmp.eq.s32.totalorder %v219, 0
        %v222 = vxor.u32 %v216, 2147483648
        %v223 = vsel %vm221, %v215, %v222
        %vm224 = vcmp.eq.s32.totalorder %v219, 2
        %v225 = vxor.u32 %v215, 2147483648
        %v226 = vsel %vm224, %v225, %v216
        %v227 = vsel %vm220, %v223, %v226
        %v228 = vsel %vm217, nan, %v227
        %s229 = smul.u32 %s16, 4
        %v230 = vstv %s229
        %v231 = vadd.s32 %v112, %v230
        %v232 = vcvt.s32.f32 %v231
        %v233 = vmul.f32 %v232, 4.0
        %v234 = vmul.f32 %v233, %v118
        %v235 = vadd.f32 %v234, %v123
        %v236 = vand.u32 2147483647, %v235
        %vm237 = vcmp.le.f32.partialorder %v236, 0.7853982
        %vm238 = vcmp.lt.s32.totalorder %v235, 0
        %v239 = vand.u32 %v235, 2139095040
        %v240 = vshrl.u32 %v239, 23
        %v241 = vsub.s32 %v240, 127
        %v242 = vand.u32 2147483647, %v235
        %v243 = vand.u32 %v242, 8388607
        %v244 = vor.u32 %v243, 8388608
        %v245 = vsub.s32 0, %v244
        %v246 = vadd.s32 %v241, 1
        %vm247 = vcmp.gt.s32.totalorder %v246, 0
        %v248 = vsel %vm247, %v246, 0
        %v249 = vshrl.u32 %v248, 5
        %v250 = vand.u32 %v248, 31
        %v251 = vsub.s32 32, %v250
        %v252 = vshrl.u32 683565275, %v251
        %v253 = vshll.u32 683565275, %v250
        %v254 = vshrl.u32 2475754826, %v251
        %v255 = vor.u32 %v253, %v254
        %v256 = vshll.u32 2475754826, %v250
        %v257 = vshrl.u32 2131351028, %v251
        %v258 = vor.u32 %v256, %v257
        %v259 = vshll.u32 2131351028, %v250
        %v260 = vshrl.u32 2102212464, %v251
        %v261 = vor.u32 %v259, %v260
        %v262 = vshll.u32 2102212464, %v250
        %v263 = vshrl.u32 920167782, %v251
        %v264 = vor.u32 %v262, %v263
        %v265 = vshll.u32 920167782, %v250
        %v266 = vshrl.u32 1326507024, %v251
        %v267 = vor.u32 %v265, %v266
        %vm268 = vcmp.lt.s32.totalorder %v249, 1
        %vm269 = vcmp.lt.s32.totalorder %v249, 2
        %vm270 = vcmp.lt.s32.totalorder %v249, 3
        %vm271 = vcmp.lt.s32.totalorder %v249, 4
        %v272 = vsel %vm268, %v252, %v255
        %v273 = vsel %vm271, %v261, 2102212464
        %v274 = vsel %vm270, %v258, %v273
        %v275 = vsel %vm269, %v272, %v274
        %v276 = vsel %vm268, %v255, %v258
        %v277 = vsel %vm271, %v264, 920167782
        %v278 = vsel %vm270, %v261, %v277
        %v279 = vsel %vm269, %v276, %v278
        %v280 = vsel %vm268, %v258, %v261
        %v281 = vsel %vm271, %v267, 1326507024
        %v282 = vsel %vm270, %v264, %v281
        %v283 = vsel %vm269, %v280, %v282
        %v284 = vshll.u32 %v244, 8
        %v285 = vmul.u32.u64.compose %v284, %v283
        %v286 = vextract.low.u32 %v285
        %v287 = vextract.high.u32 %v285
        %v288 = vmul.u32.u64.compose %v284, %v279
        %v289 = vextract.low.u32 %v288
        %v290 = vextract.high.u32 %v288
        %v291 = vmul.u32 %v284, %v275
        %v292 = vadd.s32 %v287, %v289
        %vm293 = vc.u32 %v287, %v289
        %v294 = vadd.s32 %v290, 1
        %v295 = vsel %vm293, %v294, %v290
        %v296 = vadd.s32 %v291, %v295
        %v297 = vadd.s32 %v296, 536870912
        %v298 = vshrl.u32 %v297, 30
        %v299 = vshll.u32 %v298, 30
        %v300 = vsub.s32 %v296, %v299
        %vm301 = vcmp.lt.s32.totalorder %v300, 0
        %v302 = vsub.s32 0, %v300
        %v303 = vsel %vm301, %v302, %v300
        %v304 = vclz %v303
        %v305 = vsub.s32 %v304, 2
        %vm306 = vcmp.gt.s32.totalorder 0, %v305
        %v307 = vsel %vm306, 0, %v305
        %v308 = vsub.s32 32, %v307
        %v309 = vshll.u32 %v300, %v307
        %v310 = vshrl.u32 %v292, %v308
        %v311 = vor.u32 %v309, %v310
        %v312 = vsub.s32 4294967266, %v307
        %v313 = vadd.s32 %v312, 127
        %v314 = vshll.u32 %v313, 23
        %v315 = vor.u32 4788187, %v314
        %v316 = vand.u32 2147483647, %v315
        %v318 = vcvt.s32.f32 %v311
        %v319 = vmul.f32 %v318, %v316
        %v320 = vxor.u32 %v319, 2147483648
        %v321 = vsel %vm238, %v320, %v319
        %v322 = vsub.s32 4, %v298
        %v323 = vsel %vm238, %v322, %v298
        %v324 = vsel %vm237, %v235, %v321
        %v325 = vsel %vm237, 0, %v323
        %v326 = vcosq.f32.pop %v324
        %v327 = vsinq.f32.pop %v324
        %vm328 = vweird.f32 %v235
        %v329 = vadd.s32 %v325, 3
        %v330 = vand.u32 %v329, 3
        %vm331 = vcmp.lt.s32.totalorder %v330, 2
        %vm332 = vcmp.eq.s32.totalorder %v330, 0
        %v333 = vxor.u32 %v327, 2147483648
        %v334 = vsel %vm332, %v326, %v333
        %vm335 = vcmp.eq.s32.totalorder %v330, 2
        %v336 = vxor.u32 %v326, 2147483648
        %v337 = vsel %vm335, %v336, %v327
        %v338 = vsel %vm331, %v334, %v337
        %v339 = vsel %vm328, nan, %v338
        %vm340 = vcmask 130048
        %341 = vst.msk [vmem:[%s107] sm:$0xff] %vm340, %v228
        %342 = vst.msk [vmem:[%s107 + $0x8] sm:$0xff] %vm340, %v228
        %343 = vst.msk [vmem:[%s107 + $0x10] sm:$0xff] %vm340, %v228
        %344 = vst.msk [vmem:[%s107 + $0x18] sm:$0xff] %vm340, %v228
        %v347 = vunpack.c.l.s4 1966171168
        %v348 = vunpack.c.0.s8 %v347
        %v349 = vlaneseq
        %v350 = vshrl.u32 %v349, 7
        %v351 = vsub.s32 %v348, %v350
        %v352 = vrot.slane %v339, %v351
        %v353 = vcombine.high %v352, %v352
        %v355 = vunpack.c.l.s4 1966171168
        %v356 = vunpack.c.0.s8 %v355
        %v357 = vlaneseq
        %v358 = vshrl.u32 %v357, 7
        %v359 = vsub.s32 %v356, %v358
        %v360 = vrot.slane %v352, %v359
        %v362 = vunpack.c.l.s4 1966171168
        %v363 = vunpack.c.0.s8 %v362
        %v364 = vlaneseq
        %v365 = vshrl.u32 %v364, 7
        %v366 = vsub.s32 %v363, %v365
        %v367 = vrot.slane %v353, %v366
        %v368 = vcombine.high %v360, %v360
        %v369 = vcombine.high %v367, %v367
        %v370 = vlaneseq
        %v371 = vshrl.u32 %v370, 7
        %v372 = vsub.s32 0, %v371
        %v373 = vrot.slane %v360, %v372
        %v374 = vlaneseq
        %v375 = vshrl.u32 %v374, 7
        %v376 = vsub.s32 0, %v375
        %v377 = vrot.slane %v367, %v376
        %v378 = vlaneseq
        %v379 = vshrl.u32 %v378, 7
        %v380 = vsub.s32 0, %v379
        %v381 = vrot.slane %v368, %v380
        %v382 = vlaneseq
        %v383 = vshrl.u32 %v382, 7
        %v384 = vsub.s32 0, %v383
        %v385 = vrot.slane %v369, %v384
        %386 = vrot.lane.b32.xlu0 %v373, 16
        %v387 = vpop.permute.xlu0 %386
        %388 = vrot.lane.b32.xlu0 %v377, 16
        %v389 = vpop.permute.xlu0 %388
        %390 = vrot.lane.b32.xlu0 %v381, 16
        %v391 = vpop.permute.xlu0 %390
        %392 = vrot.lane.b32.xlu0 %v385, 16
        %v393 = vpop.permute.xlu0 %392
        %vm398 = vcmask 261248
        %399 = vst.msk [vmem:[%s107] sm:$0xff] %vm398, %v387
        %400 = vst.msk [vmem:[%s107 + $0x8] sm:$0xff] %vm398, %v389
        %401 = vst.msk [vmem:[%s107 + $0x10] sm:$0xff] %vm398, %v391
        %402 = vst.msk [vmem:[%s107 + $0x18] sm:$0xff] %vm398, %v393
        %s403 = sand.u32 %s45, 1
        %s404 = scalar_lea.sflag [#allocation4], %s403
        %s405 = sand.u32 %s45, 1
        %s406 = smul.addr %s405, 32
        %s407 = scalar_lea.vmem [#allocation5], %s406
        // Predicated region
        $region29: #{tpu_custom_call.1} parent=23 // pred_check
          %p408 = pneg %p55
        $region30: #{tpu_custom_call.1} parent=23 // pred_check_branch
          %410 = sbr.rel (%p408) target = $region32
        $region31: #{tpu_custom_call.1} parent=23 // pred_region
          %s411 = smul.u32 4, %s16
          %s413 = ssub.s32 512, 512
          %414 = vsyncadd %s404, %s413
          %s415 = smul.addr %s411, 128
          %s416 = scalar_lea.hbm %s1, %s415
          %s417 = sshll.u32 %s407, 4
          %s418 = int_to_ptr.vmem [resolvable:$true] %s417
          %423 = dma.vmem_to_hbm [thread:$0]  %s418, 512, %s416, %s404, 128, 128, 8
        $region32: #{tpu_custom_call.1} parent=23 // pred_fallthru
          _
      $region24: #{tpu_custom_call.1} parent=5 // pred_fallthru
        _
      %p424 = scmp.le.s32.totalorder 2, %s11
      // Predicated region
      $region33: #{tpu_custom_call.1} parent=5 // pred_check
        %p425 = pneg %p424
      $region34: #{tpu_custom_call.1} parent=5 // pred_check_branch
        %427 = sbr.rel (%p425) target = $region36
      $region35: #{tpu_custom_call.1} parent=5 // pred_region
        %s428 = ssub.s32 %s11, 2
        // Predicated region
        $region37: #{tpu_custom_call.1} parent=35 // pred_check
          %p429 = pneg %p61
        $region38: #{tpu_custom_call.1} parent=35 // pred_check_branch
          %431 = sbr.rel (%p429) target = $region40
        $region39: #{tpu_custom_call.1} parent=35 // pred_region
          %s432 = sand.u32 %s46, 1
          %s433 = scalar_lea.sflag [#allocation4], %s432
          %s434 = sand.u32 %s46, 1
          %s435 = smul.addr %s434, 32
          %s436 = scalar_lea.vmem [#allocation5], %s435
          %437 = dma.done %s433, 512
        $region40: #{tpu_custom_call.1} parent=35 // pred_fallthru
          _
      $region36: #{tpu_custom_call.1} parent=5 // pred_fallthru
        _
    $region6: #{tpu_custom_call.1} parent=1 // loop_footer
      %s15 = sadd.s32 1, %s11
    $region7: #{tpu_custom_call.1} parent=1 // loop_footer_branch
      %10 = sbr.rel target = $region3
    $region8: #{tpu_custom_call.1} parent=1 // loop_exit
      _
    %438 = vsyncpa [#allocation3], 1
    %s439 = scalar_lea.sflag [#allocation3], 1
    %440 = vsyncpa %s439, 1
    %441 = vsyncpa [#allocation4], 1
    %s442 = scalar_lea.sflag [#allocation4], 1
    %443 = vsyncpa %s442, 1

</llo_original>
